<compile_context>
chip_gen: v7x
topology: tpu7x:2x2x1
jax: 0.10.0
libtpu: 0.0.40
codegen_flags: <defaults>
</compile_context>

<pallas_src>
import functools

import jax
import jax.numpy as jnp
from jax.experimental import pallas as pl
from jax.experimental.pallas import tpu as pltpu


def _round_up(x, m):
    return (x + m - 1) // m * m


# ----------------------------- Pallas GEMM kernel -----------------------------

def _spconv_gemm_kernel(w_ref, x_ref, b_ref, o_ref):
    """One grid step: (cout, K) x (K, tm) -> (cout, tm), fused bias, f32 out.

    K (= kh*kw*cin) is contracted in a single MXU pass; the accumulator is a
    register value (no scratch VMEM, no reduction grid axis, single store).
    """
    acc = jnp.dot(w_ref[...], x_ref[...], preferred_element_type=jnp.float32)
    o_ref[...] = acc + b_ref[...]          # lane-broadcast bias, f32 epilogue


def conv_as_gemm_pallas(im2col, w_kc, bias, *, m_valid, tile_m_target=1024):
    """im2col: (N, K, M) bf16, w_kc: (cout, K) bf16, bias: (cout,) f32.

    Returns (N, cout, m_valid) f32 (channel-first, spatial on lanes).
    Grid = (N, m_tiles), both axes parallel (megacore-friendly on v7x).
    """
    n, k, m = im2col.shape
    cout = w_kc.shape[0]

    k_pad = _round_up(k, 8)
    cout_pad = _round_up(cout, 8)
    tm = min(tile_m_target, _round_up(m, 128))     # lane-dense M tile
    m_pad = _round_up(m, tm)

    x_p = jnp.pad(im2col, ((0, 0), (0, k_pad - k), (0, m_pad - m)))
    w_p = jnp.pad(w_kc, ((0, cout_pad - cout), (0, k_pad - k)))
    b_p = jnp.pad(bias.astype(jnp.float32), (0, cout_pad - cout)).reshape(cout_pad, 1)

    # VMEM budget derived from the actual block sizes (+ headroom), not hard-coded.
    needed = (2 * k_pad * tm * 2          # im2col block, double-buffered, bf16
              + 2 * cout_pad * tm * 4     # output block, double-buffered, f32
              + cout_pad * k_pad * 2      # resident weight, bf16
              + cout_pad * 4)             # resident bias, f32
    vmem_limit = int(min(max(2 * needed + (1 << 20), 4 << 20), 48 << 20))

    out = pl.pallas_call(
        _spconv_gemm_kernel,
        out_shape=jax.ShapeDtypeStruct((n, cout_pad, m_pad), jnp.float32),
        grid=(n, m_pad // tm),
        in_specs=[
            # Weight / bias: constant index_map -> DMA'd once, resident in VMEM.
            pl.BlockSpec((cout_pad, k_pad), lambda b, mi: (0, 0)),
            pl.BlockSpec((None, k_pad, tm), lambda b, mi: (b, 0, mi)),
            pl.BlockSpec((cout_pad, 1), lambda b, mi: (0, 0)),
        ],
        out_specs=pl.BlockSpec((None, cout_pad, tm), lambda b, mi: (b, 0, mi)),
        compiler_params=pltpu.CompilerParams(
            dimension_semantics=("parallel", "parallel"),
            vmem_limit_bytes=vmem_limit,
        ),
    )(w_p, x_p, b_p)

    return out[:, :cout, :m_valid]


# --------------------------- SpConv2d forward (NCHW) ---------------------------

def _quarter_shift_pad_nchw(x_nchw, conv_padding, dtype):
    """torch-style 4-way channel split + corner zero-pads, fused with the conv's
    own spatial padding and the dtype cast (one pad per quarter, NCHW layout)."""
    c = x_nchw.shape[1]
    p = conv_padding
    x = x_nchw.astype(dtype)
    # (group, (left, right, top, bottom)) exactly as in the torch forward.
    groups = [
        (x[:, : c // 4],               (1, 0, 1, 0)),
        (x[:, c // 4: c // 2],         (0, 1, 1, 0)),
        (x[:, c // 2: c // 4 * 3],     (1, 0, 0, 1)),
        (x[:, c // 4 * 3: c],          (0, 1, 0, 1)),
    ]
    padded = [
        jnp.pad(g, ((0, 0), (0, 0), (t + p, bo + p), (l + p, r + p)))
        for g, (l, r, t, bo) in groups
    ]
    return jnp.concatenate(padded, axis=1)          # (N, C, H+1+2p, W+1+2p)


def sp_conv2d_forward(params, x_nchw, *, stride, padding):
    w_hwio = params["w"]
    bias = params["b"]
    kh, kw, cin, cout = w_hwio.shape
    n, c, _, _ = x_nchw.shape
    assert c == cin

    xp = _quarter_shift_pad_nchw(x_nchw, padding, jnp.bfloat16)   # (N, C, Hp, Wp)
    hp, wp = xp.shape[2], xp.shape[3]
    ho = (hp - kh) // stride + 1
    wo = (wp - kw) // stride + 1

    # Light host-side im2col (cin is tiny): K = kh*kw*cin arrives lane/sublane
    # contiguous for the kernel, stride is folded into the tap slices (no
    # dense-then-subsample), and no transpose of the NCHW activation is needed.
    # TODO(synk): for large cin / large feature maps, gather the taps in-kernel
    # from halo'd row windows (pl.ANY + make_async_copy streaming) instead of
    # materialising the kh*kw-fold im2col in HBM.
    taps = []
    for dy in range(kh):
        for dx in range(kw):
            t = xp[:, :, dy: dy + (ho - 1) * stride + 1: stride,
                         dx: dx + (wo - 1) * stride + 1: stride]
            taps.append(t.reshape(n, c, ho * wo))
    im2col = jnp.stack(taps, axis=1).reshape(n, kh * kw * c, ho * wo)

    # (kh, kw, cin, cout) -> (cout, K) with K ordered (dy, dx, cin) to match im2col.
    w_kc = w_hwio.reshape(kh * kw * cin, cout).T.astype(jnp.bfloat16)

    y = conv_as_gemm_pallas(im2col, w_kc, bias, m_valid=ho * wo)
    return y.reshape(n, cout, ho, wo)               # already NCHW, no transpose


def sp_conv2d_reference(params, x_nchw, *, stride, padding):
    """Pure-JAX (XLA conv) reference with identical semantics, f32 throughout."""
    xp = _quarter_shift_pad_nchw(x_nchw, 0, jnp.float32)
    y = jax.lax.conv_general_dilated(
        xp, params["w"], window_strides=(stride, stride),
        padding=[(padding, padding), (padding, padding)],
        dimension_numbers=("NCHW", "HWIO", "NCHW"))
    return y + params["b"].reshape(1, -1, 1, 1)


# ------------------------------------ main -------------------------------------

if __name__ == "__main__":
    key = jax.random.PRNGKey(0)
    k_x, k_w, k_b = jax.random.split(key, 3)

    N, C, H, W = 2, 4, 16, 16               # SpConv2d's channel split wants C % 4 == 0
    COUT, KSIZE, STRIDE, PADDING = 16, 3, 1, 1

    x = jax.random.normal(k_x, (N, C, H, W), jnp.float32)
    params = {
        "w": jax.random.normal(k_w, (KSIZE, KSIZE, C, COUT), jnp.float32)
             * (1.0 / float(KSIZE * KSIZE * C) ** 0.5),        # HWIO weights
        "b": jax.random.normal(k_b, (COUT,), jnp.float32) * 0.1,
    }

    fwd = jax.jit(functools.partial(sp_conv2d_forward, stride=STRIDE, padding=PADDING))
    out = jax.block_until_ready(fwd(params, x))

    ref = sp_conv2d_reference(params, x, stride=STRIDE, padding=PADDING)

    assert out.shape == (N, COUT, H + 1, W + 1), out.shape
    assert bool(jnp.all(jnp.isfinite(out)))
    max_err = float(jnp.max(jnp.abs(out - ref)))
    assert max_err < 5e-2, f"max abs error vs XLA conv reference: {max_err}"
    print("KERNEL_OK")
</pallas_src>

<mosaic_0001>
module attributes {stable_mosaic.version = 11 : i64} {
  func.func @_spconv_gemm_kernel(%arg0: i32, %arg1: i32, %arg2: memref<16x40xbf16, #tpu.memory_space<vmem>>, %arg3: memref<1x40x384xbf16, #tpu.memory_space<vmem>>, %arg4: memref<16x1xf32, #tpu.memory_space<vmem>>, %arg5: memref<1x16x384xf32, #tpu.memory_space<vmem>>) attributes {dimension_semantics = [#tpu.dimension_semantics<parallel>, #tpu.dimension_semantics<parallel>], iteration_bounds = array<i64: 2, 1>, scalar_prefetch = 0 : i64, scratch_operands = 0 : i64, tpu.core_type = #tpu.core_type<tc>, window_params = [{pipeline_mode = #tpu.pipeline_mode<synchronous>, transform_indices = @transform_0, window_bounds = array<i64: 16, 40>}, {transform_indices = @transform_1, window_bounds = array<i64: 1, 40, 384>}, {pipeline_mode = #tpu.pipeline_mode<synchronous>, transform_indices = @transform_2, window_bounds = array<i64: 16, 1>}, {transform_indices = @transform_3, window_bounds = array<i64: 1, 16, 384>}]} {
    %c0 = arith.constant 0 : index
    %c0_0 = arith.constant 0 : index
    %0 = vector.load %arg2[%c0, %c0_0] : memref<16x40xbf16, #tpu.memory_space<vmem>>, vector<16x40xbf16>
    %c0_1 = arith.constant 0 : index
    %c0_2 = arith.constant 0 : index
    %c0_3 = arith.constant 0 : index
    %1 = vector.load %arg3[%c0_1, %c0_2, %c0_3] : memref<1x40x384xbf16, #tpu.memory_space<vmem>>, vector<1x40x384xbf16>
    %2 = vector.shape_cast %1 : vector<1x40x384xbf16> to vector<40x384xbf16>
    %cst = arith.constant dense<0.000000e+00> : vector<16x384xf32>
    %3 = tpu.matmul %0, %2, %cst {dimension_numbers = #tpu.dot_dimension_numbers<[1], [0], [0], [1], [0, 0, 1, 1], [], []>} : vector<16x40xbf16>, vector<40x384xbf16>, vector<16x384xf32> -> vector<16x384xf32>
    %c0_4 = arith.constant 0 : index
    %c0_5 = arith.constant 0 : index
    %4 = vector.load %arg4[%c0_4, %c0_5] : memref<16x1xf32, #tpu.memory_space<vmem>>, vector<16x1xf32>
    %5 = vector.broadcast %4 : vector<16x1xf32> to vector<16x384xf32>
    %6 = arith.addf %3, %5 : vector<16x384xf32>
    %c0_6 = arith.constant 0 : index
    %c0_7 = arith.constant 0 : index
    %c0_8 = arith.constant 0 : index
    %7 = vector.load %arg5[%c0_6, %c0_7, %c0_8] : memref<1x16x384xf32, #tpu.memory_space<vmem>>, vector<1x16x384xf32>
    %8 = vector.shape_cast %7 : vector<1x16x384xf32> to vector<16x384xf32>
    %9 = vector.shape_cast %6 : vector<16x384xf32> to vector<1x16x384xf32>
    tpu.vector_store %arg5[%c0_6, %c0_7, %c0_8], %9 {strides = array<i32>} : memref<1x16x384xf32, #tpu.memory_space<vmem>>, vector<1x16x384xf32>,
    return
  }
  func.func @transform_0(%arg0: i32, %arg1: i32) -> (i32, i32) {
    %c0_i32 = arith.constant 0 : i32
    %c0_i32_0 = arith.constant 0 : i32
    %c0_i32_1 = arith.constant 0 : i32
    return %c0_i32, %c0_i32_0 : i32, i32
  }
  func.func @transform_1(%arg0: i32, %arg1: i32) -> (i32, i32, i32) {
    %c0_i32 = arith.constant 0 : i32
    %c0_i32_0 = arith.constant 0 : i32
    return %arg0, %c0_i32, %arg1 : i32, i32, i32
  }
  func.func @transform_2(%arg0: i32, %arg1: i32) -> (i32, i32) {
    %c0_i32 = arith.constant 0 : i32
    %c0_i32_0 = arith.constant 0 : i32
    %c0_i32_1 = arith.constant 0 : i32
    return %c0_i32, %c0_i32_0 : i32, i32
  }
  func.func @transform_3(%arg0: i32, %arg1: i32) -> (i32, i32, i32) {
    %c0_i32 = arith.constant 0 : i32
    %c0_i32_0 = arith.constant 0 : i32
    return %arg0, %c0_i32, %arg1 : i32, i32, i32
  }
}

</mosaic_0001>

<llo_original>
// kernel: sp_conv2d_forward.1
$region0: #{sp_conv2d_forward.1}
  #allocation0 [shape = 'u32[]', space=smem, size = 0x4, offset = 0x4, fixed_abs, tag = 'smem constant byte address 0x4 - core index']
  #allocation1 [shape = 'u32[144,128]{1,0:T(1,128)}', space=vmem, size = 0x12000, scoped, tag = 'internal scratch']
  %s0 = inlined_call_operand.vmem [shape: bf16[16,40], index: 0, kind: input, shape index: {}]
  %s1 = inlined_call_operand.vmem [shape: bf16[2,40,384], index: 1, kind: input, shape index: {}]
  %s2 = inlined_call_operand.vmem [shape: f32[16,1], index: 2, kind: input, shape index: {}]
  %s3 = inlined_call_operand.vmem [shape: f32[2,16,384], index: 3, kind: output, shape index: {}]
  %s4 = sld [smem:[#allocation0]]
  $region45: #{sp_conv2d_forward.1} parent=0
    _
  %s6 = ssub.s32 1, %s4
  %s7 = scalar_select 0, %s6, %s4
  loop: start=0, step=1, limit=4
  $region2: #{sp_conv2d_forward.1} parent=0 // loop_pre_header
    _
  $region3: #{sp_conv2d_forward.1} parent=0 // loop_header
    %s9 = sphi 0, %s13
    %p10 = scmp.ge.s32.totalorder %s9, 4
    %s16 = sphi 0, %s28
    %s17 = sphi 0, %s24
    %s18 = sphi 0, %s16
    %s19 = sphi 0, %s17
    %s20 = sphi 0, %s18
    %s21 = sphi 0, %s19
    %s29 = sphi 0, %s29
    %s31 = sphi 0, %s29
    %s32 = sphi 0, %s31
    %s46 = sphi 0, %s32
    %s54 = sphi 0, %s56
    %s57 = sphi 0, %s54
    %s58 = sphi 0, %s57
    %s74 = sphi 0, %s58
    %s78 = sphi 0, %s78
    %s80 = sphi 0, %s78
    %s81 = sphi 0, %s80
    %s95 = sphi 0, %s81
    %s103 = sphi 0, %s105
    %s106 = sphi 0, %s103
    %s107 = sphi 0, %s106
    %s123 = sphi 0, %s107
  $region4: #{sp_conv2d_forward.1} parent=0 // loop_header_branch
    %12 = sbr.rel (%p10) target = $region8
  $region5: #{sp_conv2d_forward.1} parent=0 // loop_body
    %s14 = ssub.s32 %s9, 1
    %s15 = ssub.s32 %s9, 2
    %s22 = sadd.s32 1, %s17
    %p23 = scmp.ge.s32.totalorder %s22, 1
    %s24 = scalar_select %p23, 0, %s22
    %s25 = sadd.s32 1, %s16
    %s26 = scalar_select %p23, %s25, %s16
    %p27 = scmp.ge.s32.totalorder %s26, 2
    %s28 = scalar_select %p27, 0, %s26
    %s30 = sadd.s32 %s29, 1
    %p33 = scmp.eq.s32.totalorder %s9, 1
    %p34 = scmp.ne.s32.totalorder %s29, %s31
    %p35 = scmp.eq.s32.totalorder %s9, 0
    %p36 = por %p34, %p35
    %p37 = scmp.ne.s32.totalorder %s29, %s31
    %p38 = scmp.eq.s32.totalorder %s14, 1
    %p39 = por %p37, %p38
    %p40 = scmp.ne.s32.totalorder %s31, %s32
    %p41 = scmp.eq.s32.totalorder %s14, 0
    %p42 = por %p40, %p41
    %p43 = scmp.ne.s32.totalorder %s31, %s32
    %p44 = scmp.eq.s32.totalorder %s15, 1
    %p45 = por %p43, %p44
    %p47 = scmp.ne.s32.totalorder %s32, %s46
    %p48 = scmp.eq.s32.totalorder %s15, 0
    %p49 = por %p47, %p48
    %s50 = ssub.s32 %s16, %s28
    %s51 = ssub.s32 %s17, %s24
    %s52 = sor.u32 %s50, %s51
    %p53 = scmp.eq.s32.totalorder %s52, 0
    %s55 = sadd.s32 %s54, 1
    %s56 = scalar_select %p53, %s54, %s55
    %p59 = pneg %p53
    %p60 = scmp.eq.s32.totalorder %s9, 1
    %p61 = por %p59, %p60
    %p62 = scmp.ne.s32.totalorder %s54, %s57
    %p63 = scmp.eq.s32.totalorder %s9, 0
    %p64 = por %p62, %p63
    %p65 = scmp.ne.s32.totalorder %s54, %s57
    %p66 = scmp.eq.s32.totalorder %s14, 1
    %p67 = por %p65, %p66
    %p68 = scmp.ne.s32.totalorder %s57, %s58
    %p69 = scmp.eq.s32.totalorder %s14, 0
    %p70 = por %p68, %p69
    %p71 = scmp.ne.s32.totalorder %s57, %s58
    %p72 = scmp.eq.s32.totalorder %s15, 1
    %p73 = por %p71, %p72
    %p75 = scmp.ne.s32.totalorder %s58, %s74
    %p76 = scmp.eq.s32.totalorder %s15, 0
    %p77 = por %p75, %p76
    %s79 = sadd.s32 %s78, 1
    %p82 = scmp.eq.s32.totalorder %s9, 1
    %p83 = scmp.ne.s32.totalorder %s78, %s80
    %p84 = scmp.eq.s32.totalorder %s9, 0
    %p85 = por %p83, %p84
    %p86 = scmp.ne.s32.totalorder %s78, %s80
    %p87 = scmp.eq.s32.totalorder %s14, 1
    %p88 = por %p86, %p87
    %p89 = scmp.ne.s32.totalorder %s80, %s81
    %p90 = scmp.eq.s32.totalorder %s14, 0
    %p91 = por %p89, %p90
    %p92 = scmp.ne.s32.totalorder %s80, %s81
    %p93 = scmp.eq.s32.totalorder %s15, 1
    %p94 = por %p92, %p93
    %p96 = scmp.ne.s32.totalorder %s81, %s95
    %p97 = scmp.eq.s32.totalorder %s15, 0
    %p98 = por %p96, %p97
    %s99 = ssub.s32 %s16, %s28
    %s100 = ssub.s32 %s17, %s24
    %s101 = sor.u32 %s99, %s100
    %p102 = scmp.eq.s32.totalorder %s101, 0
    %s104 = sadd.s32 %s103, 1
    %s105 = scalar_select %p102, %s103, %s104
    %p108 = pneg %p102
    %p109 = scmp.eq.s32.totalorder %s9, 1
    %p110 = por %p108, %p109
    %p111 = scmp.ne.s32.totalorder %s103, %s106
    %p112 = scmp.eq.s32.totalorder %s9, 0
    %p113 = por %p111, %p112
    %p114 = scmp.ne.s32.totalorder %s103, %s106
    %p115 = scmp.eq.s32.totalorder %s14, 1
    %p116 = por %p114, %p115
    %p117 = scmp.ne.s32.totalorder %s106, %s107
    %p118 = scmp.eq.s32.totalorder %s14, 0
    %p119 = por %p117, %p118
    %p120 = scmp.ne.s32.totalorder %s106, %s107
    %p121 = scmp.eq.s32.totalorder %s15, 1
    %p122 = por %p120, %p121
    %p124 = scmp.ne.s32.totalorder %s107, %s123
    %p125 = scmp.eq.s32.totalorder %s15, 0
    %p126 = por %p124, %p125
    %p127 = scmp.le.s32.totalorder 1, %s9
    %p128 = scmp.lt.s32.totalorder %s9, 3
    %p129 = pnand %p127, %p128
    %p130 = pneg %p129
    // Predicated region
    $region9: #{sp_conv2d_forward.1} parent=5 // pred_check
      _
    $region10: #{sp_conv2d_forward.1} parent=5 // pred_check_branch
      %132 = sbr.rel (%p129) target = $region12
    $region11: #{sp_conv2d_forward.1} parent=5 // pred_region
      %s133 = ssub.s32 %s9, 1
      // Predicated region
      $region13: #{sp_conv2d_forward.1} parent=11 // pred_check
        %p134 = pneg %p42
      $region14: #{sp_conv2d_forward.1} parent=11 // pred_check_branch
        %136 = sbr.rel (%p134) target = $region16
      $region15: #{sp_conv2d_forward.1} parent=11 // pred_region
        _
      $region16: #{sp_conv2d_forward.1} parent=11 // pred_fallthru
        _
      // Predicated region
      $region17: #{sp_conv2d_forward.1} parent=11 // pred_check
        %p137 = pneg %p91
      $region18: #{sp_conv2d_forward.1} parent=11 // pred_check_branch
        %139 = sbr.rel (%p137) target = $region20
      $region19: #{sp_conv2d_forward.1} parent=11 // pred_region
        _
      $region20: #{sp_conv2d_forward.1} parent=11 // pred_fallthru
        _
    $region12: #{sp_conv2d_forward.1} parent=5 // pred_fallthru
      _
    %p140 = scmp.lt.s32.totalorder %s9, 2
    // Predicated region
    $region21: #{sp_conv2d_forward.1} parent=5 // pred_check
      %p141 = pneg %p140
    $region22: #{sp_conv2d_forward.1} parent=5 // pred_check_branch
      %143 = sbr.rel (%p141) target = $region24
    $region23: #{sp_conv2d_forward.1} parent=5 // pred_region
      // Predicated region
      $region25: #{sp_conv2d_forward.1} parent=23 // pred_check
        %p144 = pneg %p64
      $region26: #{sp_conv2d_forward.1} parent=23 // pred_check_branch
        %146 = sbr.rel (%p144) target = $region28
      $region27: #{sp_conv2d_forward.1} parent=23 // pred_region
        %s147 = smul.u32 3, %s17
        %p148 = scmp.lt.s32.totalorder %s16, 1
        %s149 = scalar_select %p148, %s16, 1
        %p150 = scmp.lt.s32.totalorder %s147, 2
        %s151 = scalar_select %p150, %s147, 2
        %s152 = smul.addr %s149, 15
        %s153 = sadd.s32 %s151, %s152
        %s154 = smul.addr %s153, 4
        %s155 = scalar_lea.vmem %s1, %s154
        %s156 = smul.u32 3, %s17
      $region28: #{sp_conv2d_forward.1} parent=23 // pred_fallthru
        _
    $region24: #{sp_conv2d_forward.1} parent=5 // pred_fallthru
      _
    %p157 = scmp.le.s32.totalorder 1, %s9
    %p158 = scmp.lt.s32.totalorder %s9, 3
    %p159 = pnand %p157, %p158
    %p160 = pneg %p159
    // Predicated region
    $region29: #{sp_conv2d_forward.1} parent=5 // pred_check
      _
    $region30: #{sp_conv2d_forward.1} parent=5 // pred_check_branch
      %162 = sbr.rel (%p159) target = $region32
    $region31: #{sp_conv2d_forward.1} parent=5 // pred_region
      %s163 = ssub.s32 %s9, 1
      %p164 = pneg %p42
      %p165 = pneg %p39
      %s166 = smul.u32 3, %s19
      %p167 = scmp.lt.s32.totalorder %s18, 1
      %s168 = scalar_select %p167, %s18, 1
      %p169 = scmp.lt.s32.totalorder %s166, 2
      %s170 = scalar_select %p169, %s166, 2
      %s171 = smul.addr %s168, 15
      %s172 = sadd.s32 %s170, %s171
      %s173 = smul.addr %s172, 4
      %s174 = scalar_lea.vmem %s1, %s173
      %p175 = pneg %p70
      %p176 = pneg %p67
      %p177 = pneg %p91
      %p178 = pneg %p88
      %p179 = pneg %p119
      %p180 = pneg %p116
      %s181 = smul.u32 3, %s19
      %p182 = scmp.lt.s32.totalorder %s18, 1
      %s183 = scalar_select %p182, %s18, 1
      %p184 = scmp.lt.s32.totalorder %s181, 2
      %s185 = scalar_select %p184, %s181, 2
      %s186 = smul.addr %s183, 6
      %s187 = sadd.s32 %s185, %s186
      %s188 = smul.addr %s187, 8
      %s189 = scalar_lea.vmem %s3, %s188
      %s190 = smul.u32 3, %s19
      %p191 = scmp.lt.s32.totalorder %s18, 1
      %s192 = scalar_select %p191, %s18, 1
      %p193 = scmp.lt.s32.totalorder %s190, 2
      %s194 = scalar_select %p193, %s190, 2
      %s195 = smul.addr %s192, 15
      %s196 = sadd.s32 %s194, %s195
      %s197 = smul.addr %s196, 4
      %s198 = scalar_lea.vmem %s1, %s197
      %s199 = smul.u32 3, %s19
      %s200 = smul.u32 3, %s19
      %p201 = scmp.lt.s32.totalorder %s18, 1
      %s202 = scalar_select %p201, %s18, 1
      %p203 = scmp.lt.s32.totalorder %s200, 2
      %s204 = scalar_select %p203, %s200, 2
      %s205 = smul.addr %s202, 6
      %s206 = sadd.s32 %s204, %s205
      %s207 = smul.addr %s206, 8
      %s208 = scalar_lea.vmem %s3, %s207
      %s209 = smul.u32 3, %s19
      %v211 = vld [vmem:[%s0] sm:$0xf]
      %v212 = vld [vmem:[%s0 + $0x4] sm:$0xf]
      %v213 = vld [vmem:[%s198] sm:$0xff]
      %v214 = vld [vmem:[%s198 + $0x8] sm:$0xf]
      %v215 = vld [vmem:[%s198 + $0xc] sm:$0xff]
      %v216 = vld [vmem:[%s198 + $0x14] sm:$0xf]
      %v217 = vld [vmem:[%s198 + $0x18] sm:$0xff]
      %v218 = vld [vmem:[%s198 + $0x20] sm:$0xf]
      %v219 = vld [vmem:[%s198 + $0x24] sm:$0xff]
      %v220 = vld [vmem:[%s198 + $0x2c] sm:$0xf]
      %v221 = vld [vmem:[%s198 + $0x30] sm:$0xff]
      %v222 = vld [vmem:[%s198 + $0x38] sm:$0xf]
      %v223 = vld [vmem:[%s2] sm:$0xff]
      %v224 = vld [vmem:[%s2 + $0x8] sm:$0xff]
      %226 = vset.pattern.permute.xlu0 0
      %227 = vperm.xlu0 %226, %v223
      %v228 = vpop.permute.xlu0 %227
      %231 = vset.pattern.permute.xlu0 0
      %232 = vperm.xlu0 %231, %v224
      %v233 = vpop.permute.xlu0 %232
      %v237 = vunpack.c.l.b16 %v211
      %v238 = vunpack.c.l.b16 %v212
      %v239 = vpack.c.b16 %v238, %v237
      %v250 = vunpack.c.l.b16 %v213
      %v251 = vunpack.c.h.b16 %v213
      %v252 = vunpack.c.l.b16 %v214
      %v253 = vunpack.c.l.b16 %v215
      %v254 = vunpack.c.h.b16 %v215
      %v255 = vunpack.c.l.b16 %v216
      %v256 = vunpack.c.l.b16 %v217
      %v257 = vunpack.c.h.b16 %v217
      %v258 = vunpack.c.l.b16 %v218
      %v259 = vunpack.c.l.b16 %v219
      %v260 = vunpack.c.h.b16 %v219
      %v261 = vunpack.c.l.b16 %v220
      %v262 = vunpack.c.l.b16 %v221
      %v263 = vunpack.c.h.b16 %v221
      %v264 = vunpack.c.l.b16 %v222
      %v265 = vpack.c.b16 %v253, %v250
      %v266 = vpack.c.b16 %v254, %v251
      %v267 = vpack.c.b16 %v255, %v252
      %v268 = vpack.c.b16 %v259, %v256
      %v269 = vpack.c.b16 %v260, %v257
      %v270 = vpack.c.b16 %v261, %v258
      %v271 = vpack.c.b16 %v262, %v262
      %v272 = vpack.c.b16 %v263, %v263
      %v273 = vpack.c.b16 %v264, %v264
      %vm280 = vcmask 326656
      %v282 = vsel %vm280, %v239, 0
      %vm284 = vcmask 1043456
      %v286 = vsel %vm284, %v271, 0
      %v289 = vsel %vm284, %v272, 0
      %v292 = vsel %vm284, %v273, 0
      %294 = vmatprep.subr.bf16.mxu0 %v266
      %295 = vmatpush1.bf16.msra.mxu0 %v265
      %296 = vmatprep.subr.bf16.mxu0 %v269
      %297 = vmatpush1.bf16.msra.mxu0 %v268
      %298 = vmatprep.subr.bf16.mxu0 %v289
      %299 = vmatpush1.bf16.msra.mxu0 %v286
      %300 = vmatprep.subr.bf16.mxu0 0
      %301 = vmatpush1.bf16.msra.mxu0 0
      %302 = vmatprep.subr.bf16.mxu0 0
      %303 = vmatpush1.bf16.msra.mxu0 0
      %304 = vmatprep.subr.bf16.mxu0 0
      %305 = vmatpush1.bf16.msra.mxu0 0
      %306 = vmatprep.subr.bf16.mxu0 0
      %307 = vmatpush1.bf16.msra.mxu0 0
      %308 = vmatprep.subr.bf16.mxu0 0
      %309 = vmatpush1.bf16.msra.mxu0 0
      %310 = vmatprep.subr.bf16.mxu0 0
      %311 = vmatpush1.bf16.msra.mxu0 0
      %312 = vmatprep.subr.bf16.mxu0 0
      %313 = vmatpush1.bf16.msra.mxu0 0
      %314 = vmatprep.subr.bf16.mxu0 0
      %315 = vmatpush1.bf16.msra.mxu0 0
      %316 = vmatprep.subr.bf16.mxu0 0
      %317 = vmatpush1.bf16.msra.mxu0 0
      %318 = vmatprep.subr.bf16.mxu0 0
      %319 = vmatpush1.bf16.msra.mxu0 0
      %320 = vmatprep.subr.bf16.mxu0 0
      %321 = vmatpush1.bf16.msra.mxu0 0
      %322 = vmatprep.subr.bf16.mxu0 0
      %323 = vmatpush1.bf16.msra.mxu0 0
      %324 = vmatprep.subr.bf16.mxu0 0
      %325 = vmatpush1.bf16.msra.mxu0 0
      %326 = vmatprep.mubr.bf16.mxu0 0
      %327 = vmatmul.mubr.bf16.gmra.mrb[0].mxu0 %v282
      %v328 = vpop.f32.mrb[0].mxu0
      %v329 = vadd.f32 %v228, %v328
      %v330 = vpop.f32.mrb[0].mxu0
      %v331 = vadd.f32 %v228, %v330
      %v332 = vpop.f32.mrb[0].mxu0
      %v333 = vadd.f32 %v233, %v332
      %v334 = vpop.f32.mrb[0].mxu0
      %v335 = vadd.f32 %v233, %v334
      %336 = vdwg.mxu0
      %337 = vmatprep.subr.bf16.mxu0 0
      %338 = vmatpush1.bf16.msra.mxu0 %v267
      %339 = vmatprep.subr.bf16.mxu0 0
      %340 = vmatpush1.bf16.msra.mxu0 %v270
      %341 = vmatprep.subr.bf16.mxu0 0
      %342 = vmatpush1.bf16.msra.mxu0 %v292
      %343 = vmatprep.subr.bf16.mxu0 0
      %344 = vmatpush1.bf16.msra.mxu0 0
      %345 = vmatprep.subr.bf16.mxu0 0
      %346 = vmatpush1.bf16.msra.mxu0 0
      %347 = vmatprep.subr.bf16.mxu0 0
      %348 = vmatpush1.bf16.msra.mxu0 0
      %349 = vmatprep.subr.bf16.mxu0 0
      %350 = vmatpush1.bf16.msra.mxu0 0
      %351 = vmatprep.subr.bf16.mxu0 0
      %352 = vmatpush1.bf16.msra.mxu0 0
      %353 = vmatprep.subr.bf16.mxu0 0
      %354 = vmatpush1.bf16.msra.mxu0 0
      %355 = vmatprep.subr.bf16.mxu0 0
      %356 = vmatpush1.bf16.msra.mxu0 0
      %357 = vmatprep.subr.bf16.mxu0 0
      %358 = vmatpush1.bf16.msra.mxu0 0
      %359 = vmatprep.subr.bf16.mxu0 0
      %360 = vmatpush1.bf16.msra.mxu0 0
      %361 = vmatprep.subr.bf16.mxu0 0
      %362 = vmatpush1.bf16.msra.mxu0 0
      %363 = vmatprep.subr.bf16.mxu0 0
      %364 = vmatpush1.bf16.msra.mxu0 0
      %365 = vmatprep.subr.bf16.mxu0 0
      %366 = vmatpush1.bf16.msra.mxu0 0
      %367 = vmatprep.subr.bf16.mxu0 0
      %368 = vmatpush1.bf16.msra.mxu0 0
      %369 = vmatprep.mubr.bf16.mxu0 0
      %370 = vmatmul.mubr.bf16.gmra.mrb[0].mxu0 %v282
      %v371 = vpop.f32.mrb[0].mxu0
      %v372 = vadd.f32 %v228, %v371
      %v373 = vpop.f32.mrb[0].mxu0
      %v374 = vpop.f32.mrb[0].mxu0
      %v375 = vadd.f32 %v233, %v374
      %v376 = vpop.f32.mrb[0].mxu0
      %377 = vdwg.mxu0
      %378 = vst [vmem:[%s208] sm:$0xff] %v329
      %379 = vst [vmem:[%s208 + $0x8] sm:$0xff] %v331
      %380 = vst [vmem:[%s208 + $0x10] sm:$0xff] %v372
      %381 = vst [vmem:[%s208 + $0x18] sm:$0xff] %v333
      %382 = vst [vmem:[%s208 + $0x20] sm:$0xff] %v335
      %383 = vst [vmem:[%s208 + $0x28] sm:$0xff] %v375
      %s384 = smul.u32 3, %s19
      %p385 = scmp.lt.s32.totalorder %s18, 1
      %s386 = scalar_select %p385, %s18, 1
      %p387 = scmp.lt.s32.totalorder %s384, 2
      %s388 = scalar_select %p387, %s384, 2
      %s389 = smul.addr %s386, 6
      %s390 = sadd.s32 %s388, %s389
      %s391 = smul.addr %s390, 8
      %s392 = scalar_lea.vmem %s3, %s391
      // Predicated region
      $region33: #{sp_conv2d_forward.1} parent=31 // pred_check
        %p393 = pneg %p116
      $region34: #{sp_conv2d_forward.1} parent=31 // pred_check_branch
        %395 = sbr.rel (%p393) target = $region36
      $region35: #{sp_conv2d_forward.1} parent=31 // pred_region
        %s396 = smul.u32 3, %s19
      $region36: #{sp_conv2d_forward.1} parent=31 // pred_fallthru
        _
    $region32: #{sp_conv2d_forward.1} parent=5 // pred_fallthru
      _
    %p397 = scmp.le.s32.totalorder 2, %s9
    // Predicated region
    $region37: #{sp_conv2d_forward.1} parent=5 // pred_check
      %p398 = pneg %p397
    $region38: #{sp_conv2d_forward.1} parent=5 // pred_check_branch
      %400 = sbr.rel (%p398) target = $region40
    $region39: #{sp_conv2d_forward.1} parent=5 // pred_region
      %s401 = ssub.s32 %s9, 2
      // Predicated region
      $region41: #{sp_conv2d_forward.1} parent=39 // pred_check
        %p402 = pneg %p122
      $region42: #{sp_conv2d_forward.1} parent=39 // pred_check_branch
        %404 = sbr.rel (%p402) target = $region44
      $region43: #{sp_conv2d_forward.1} parent=39 // pred_region
        %s405 = smul.u32 3, %s21
        %p406 = scmp.lt.s32.totalorder %s20, 1
        %s407 = scalar_select %p406, %s20, 1
        %p408 = scmp.lt.s32.totalorder %s405, 2
        %s409 = scalar_select %p408, %s405, 2
        %s410 = smul.addr %s407, 6
        %s411 = sadd.s32 %s409, %s410
        %s412 = smul.addr %s411, 8
        %s413 = scalar_lea.vmem %s3, %s412
      $region44: #{sp_conv2d_forward.1} parent=39 // pred_fallthru
        _
    $region40: #{sp_conv2d_forward.1} parent=5 // pred_fallthru
      _
  $region6: #{sp_conv2d_forward.1} parent=0 // loop_footer
    %s13 = sadd.s32 1, %s9
  $region7: #{sp_conv2d_forward.1} parent=0 // loop_footer_branch
    %8 = sbr.rel target = $region3
  $region8: #{sp_conv2d_forward.1} parent=0 // loop_exit
    _

</llo_original>
